<compile_context>
chip_gen: v6e
topology: v6e:2x2x1
jax: 0.10.0
libtpu: 0.0.40
codegen_flags: <defaults>
</compile_context>

<pallas_src>
import functools

import jax
import jax.numpy as jnp
from jax.experimental import pallas as pl
from jax.experimental.pallas import tpu as pltpu

# Full-f32 matmul passes for both the kernel and the jnp reference check.
jax.config.update("jax_default_matmul_precision", "highest")

IN_F = 2    # input features
HID = 10    # hidden units
OUT_F = 3   # output features


def dnn_kernel(w1_ref, b1_ref, w2_ref, b2_ref, x_ref, o_ref):
    # w1_ref: VMEM (10, 2)   Linear(2,10).weight
    # b1_ref: VMEM (10, 1)   b1 + bias1 (column vector)
    # w2_ref: VMEM (3, 10)   Linear(10,3).weight
    # b2_ref: VMEM (3, 1)    b2 + bias2 (column vector)
    # x_ref : VMEM (2, TB)   x^T batch tile, batch on the lane axis
    # o_ref : VMEM (3, TB)   out^T batch tile
    x = x_ref[...]
    # Hidden layer on the MXU: (10, 2) @ (2, TB) -> (10, TB); bias + ReLU on VPU.
    h = jnp.dot(w1_ref[...], x, preferred_element_type=jnp.float32,
                precision=jax.lax.Precision.HIGHEST)
    h = jnp.maximum(h + b1_ref[...], 0.0)
    # Output layer on the MXU: (3, 10) @ (10, TB) -> (3, TB); lane-dense store.
    o_ref[...] = jnp.dot(w2_ref[...], h, preferred_element_type=jnp.float32,
                         precision=jax.lax.Precision.HIGHEST) + b2_ref[...]


def prepare_params(w1, b1, bias1, w2, b2, bias2):
    """One-time parameter preparation (hoisted out of the forward path).

    w1: [10, 2] (PyTorch layout), b1: [10], bias1: [10]
    w2: [3, 10] (PyTorch layout), b2: [3],  bias2: [3]
    """
    w1 = jnp.asarray(w1, jnp.float32)                                  # (10, 2)
    b1c = (jnp.asarray(b1) + jnp.asarray(bias1)).astype(jnp.float32)   # (10,)
    w2 = jnp.asarray(w2, jnp.float32)                                  # (3, 10)
    b2c = (jnp.asarray(b2) + jnp.asarray(bias2)).astype(jnp.float32)   # (3,)
    return (w1, b1c.reshape(HID, 1), w2, b2c.reshape(OUT_F, 1))


def _round_up(x, m):
    return ((x + m - 1) // m) * m


def _choose_tile(batch, tb_max):
    """Pick (tile_lanes, padded_batch): lane-aligned, large, and >= 2 tiles
    whenever possible so both v7x TensorCores participate."""
    b128 = _round_up(batch, 128)
    if b128 > tb_max:
        return tb_max, _round_up(batch, tb_max)
    if b128 % 256 == 0:
        return b128 // 2, b128                   # two tiles, no extra padding
    if b128 >= 256:
        tb = _round_up(-(-b128 // 2), 128)       # two tiles, pad up to 2*tb
        return tb, 2 * tb
    return b128, b128                            # tiny batch: single 128-lane tile


@functools.partial(jax.jit, static_argnames=("tb_max",))
def dnn_forward(x, params, tb_max=65536):
    """x: [B, 2] float32. Returns [B, 3] float32 (same semantics as DNN.forward).

    tb_max: max batch-tile width in lanes (multiple of 128). 65536-lane tiles are
    ~1.3 MB of real HBM traffic per grid step and ~12 MB of double-buffered VMEM
    (within the 32 MiB limit requested below on all of v5e/v6e/v7x).
    """
    assert tb_max % 128 == 0 and tb_max >= 128
    w1, b1c, w2, b2c = params
    B = x.shape[0]
    tb, b_pad = _choose_tile(B, tb_max)

    # Batch onto the lane axis.  The pad copy is skipped when already aligned;
    # padded lanes only compute bias->relu garbage that is sliced off below.
    xt = x.astype(jnp.float32).T                        # (2, B)
    if b_pad != B:
        xt = jnp.pad(xt, ((0, 0), (0, b_pad - B)))      # (2, b_pad)

    grid = (b_pad // tb,)
    out_t = pl.pallas_call(
        dnn_kernel,
        out_shape=jax.ShapeDtypeStruct((OUT_F, b_pad), jnp.float32),
        grid=grid,
        in_specs=[
            pl.BlockSpec((HID, IN_F), lambda i: (0, 0)),    # W1 (VMEM-resident)
            pl.BlockSpec((HID, 1), lambda i: (0, 0)),       # b1 + bias1
            pl.BlockSpec((OUT_F, HID), lambda i: (0, 0)),   # W2
            pl.BlockSpec((OUT_F, 1), lambda i: (0, 0)),     # b2 + bias2
            pl.BlockSpec((IN_F, tb), lambda i: (0, i)),     # x^T batch tile
        ],
        out_specs=pl.BlockSpec((OUT_F, tb), lambda i: (0, i)),
        compiler_params=pltpu.CompilerParams(
            dimension_semantics=("parallel",),    # v7x: 2 TCs split batch tiles
            vmem_limit_bytes=32 * 1024 * 1024,    # > v5e's 16 MiB scoped default
        ),
    )(w1, b1c, w2, b2c, xt)

    # Drop padded lanes, transpose back to PyTorch's [B, 3] layout.
    return out_t[:, :B].T


def init_params(key):
    """Deterministic init matching nn.Linear's U(-1/sqrt(fan_in), 1/sqrt(fan_in))."""
    k1, k2, k3, k4 = jax.random.split(key, 4)
    lim1 = 1.0 / jnp.sqrt(2.0)
    lim2 = 1.0 / jnp.sqrt(10.0)
    w1 = jax.random.uniform(k1, (HID, IN_F), jnp.float32, -lim1, lim1)   # Linear(2,10).weight
    b1 = jax.random.uniform(k2, (HID,), jnp.float32, -lim1, lim1)        # Linear(2,10).bias
    w2 = jax.random.uniform(k3, (OUT_F, HID), jnp.float32, -lim2, lim2)  # Linear(10,3).weight
    b2 = jax.random.uniform(k4, (OUT_F,), jnp.float32, -lim2, lim2)      # Linear(10,3).bias
    bias1 = jnp.zeros((HID,), jnp.float32)    # self.bias1 (torch.zeros)
    bias2 = jnp.zeros((OUT_F,), jnp.float32)  # self.bias2 (torch.zeros)
    return w1, b1, bias1, w2, b2, bias2


if __name__ == "__main__":
    key = jax.random.PRNGKey(0)
    pkey, xkey = jax.random.split(key)
    w1, b1, bias1, w2, b2, bias2 = init_params(pkey)
    params = prepare_params(w1, b1, bias1, w2, b2, bias2)   # one-time prep

    def ref_fn(xv):
        return jnp.maximum(xv @ w1.T + b1 + bias1, 0.0) @ w2.T + b2 + bias2

    # Tolerance covers MXU pass-precision differences across TPU generations.
    TOL = dict(atol=5e-3, rtol=1e-3)

    # Small case matching the module's natural input shape.
    B = 8
    x = jax.random.normal(xkey, (B, IN_F), jnp.float32)
    out = jax.block_until_ready(dnn_forward(x, params))
    assert out.shape == (B, OUT_F)
    assert jnp.allclose(out, ref_fn(x), **TOL), "mismatch vs reference (B=8)"

    # Non-aligned batch -> padded, two 'parallel' grid tiles.
    B2 = 300
    x2 = jax.random.normal(jax.random.PRNGKey(1), (B2, IN_F), jnp.float32)
    out2 = jax.block_until_ready(dnn_forward(x2, params))
    assert out2.shape == (B2, OUT_F)
    assert jnp.allclose(out2, ref_fn(x2), **TOL), "mismatch vs reference (B=300)"

    # Explicit small tile to exercise several grid steps.
    B3 = 1024
    x3 = jax.random.normal(jax.random.PRNGKey(2), (B3, IN_F), jnp.float32)
    out3 = jax.block_until_ready(dnn_forward(x3, params, tb_max=256))
    assert out3.shape == (B3, OUT_F)
    assert jnp.allclose(out3, ref_fn(x3), **TOL), "mismatch vs reference (B=1024)"

    print("KERNEL_OK")
</pallas_src>

<mosaic_0001>
module attributes {stable_mosaic.version = 11 : i64} {
  func.func @dnn_kernel(%arg0: i32, %arg1: memref<10x2xf32, #tpu.memory_space<vmem>>, %arg2: memref<10x1xf32, #tpu.memory_space<vmem>>, %arg3: memref<3x10xf32, #tpu.memory_space<vmem>>, %arg4: memref<3x1xf32, #tpu.memory_space<vmem>>, %arg5: memref<2x128xf32, #tpu.memory_space<vmem>>, %arg6: memref<3x128xf32, #tpu.memory_space<vmem>>) attributes {dimension_semantics = [#tpu.dimension_semantics<parallel>], iteration_bounds = array<i64: 1>, scalar_prefetch = 0 : i64, scratch_operands = 0 : i64, tpu.core_type = #tpu.core_type<tc>, window_params = [{pipeline_mode = #tpu.pipeline_mode<synchronous>, transform_indices = @transform_0, window_bounds = array<i64: 10, 2>}, {pipeline_mode = #tpu.pipeline_mode<synchronous>, transform_indices = @transform_1, window_bounds = array<i64: 10, 1>}, {pipeline_mode = #tpu.pipeline_mode<synchronous>, transform_indices = @transform_2, window_bounds = array<i64: 3, 10>}, {pipeline_mode = #tpu.pipeline_mode<synchronous>, transform_indices = @transform_3, window_bounds = array<i64: 3, 1>}, {transform_indices = @transform_4, window_bounds = array<i64: 2, 128>}, {transform_indices = @transform_5, window_bounds = array<i64: 3, 128>}]} {
    %c0 = arith.constant 0 : index
    %c0_0 = arith.constant 0 : index
    %0 = vector.load %arg5[%c0, %c0_0] : memref<2x128xf32, #tpu.memory_space<vmem>>, vector<2x128xf32>
    %c0_1 = arith.constant 0 : index
    %c0_2 = arith.constant 0 : index
    %1 = vector.load %arg1[%c0_1, %c0_2] : memref<10x2xf32, #tpu.memory_space<vmem>>, vector<10x2xf32>
    %cst = arith.constant dense<0.000000e+00> : vector<10x128xf32>
    %2 = tpu.matmul %1, %0, %cst {dimension_numbers = #tpu.dot_dimension_numbers<[1], [0], [0], [1], [0, 0, 1, 1], [], []>, precision = #tpu.contract_precision<fp32>} : vector<10x2xf32>, vector<2x128xf32>, vector<10x128xf32> -> vector<10x128xf32>
    %c0_3 = arith.constant 0 : index
    %c0_4 = arith.constant 0 : index
    %3 = vector.load %arg2[%c0_3, %c0_4] : memref<10x1xf32, #tpu.memory_space<vmem>>, vector<10x1xf32>
    %4 = vector.broadcast %3 : vector<10x1xf32> to vector<10x128xf32>
    %5 = arith.addf %2, %4 : vector<10x128xf32>
    %cst_5 = arith.constant 0.000000e+00 : f32
    %6 = vector.broadcast %cst_5 : f32 to vector<10x128xf32>
    %7 = arith.maximumf %5, %6 : vector<10x128xf32>
    %c0_6 = arith.constant 0 : index
    %c0_7 = arith.constant 0 : index
    %8 = vector.load %arg3[%c0_6, %c0_7] : memref<3x10xf32, #tpu.memory_space<vmem>>, vector<3x10xf32>
    %cst_8 = arith.constant dense<0.000000e+00> : vector<3x128xf32>
    %9 = tpu.matmul %8, %7, %cst_8 {dimension_numbers = #tpu.dot_dimension_numbers<[1], [0], [0], [1], [0, 0, 1, 1], [], []>, precision = #tpu.contract_precision<fp32>} : vector<3x10xf32>, vector<10x128xf32>, vector<3x128xf32> -> vector<3x128xf32>
    %c0_9 = arith.constant 0 : index
    %c0_10 = arith.constant 0 : index
    %10 = vector.load %arg4[%c0_9, %c0_10] : memref<3x1xf32, #tpu.memory_space<vmem>>, vector<3x1xf32>
    %11 = vector.broadcast %10 : vector<3x1xf32> to vector<3x128xf32>
    %12 = arith.addf %9, %11 : vector<3x128xf32>
    %c0_11 = arith.constant 0 : index
    %c0_12 = arith.constant 0 : index
    %13 = vector.load %arg6[%c0_11, %c0_12] : memref<3x128xf32, #tpu.memory_space<vmem>>, vector<3x128xf32>
    tpu.vector_store %arg6[%c0_11, %c0_12], %12 {strides = array<i32>} : memref<3x128xf32, #tpu.memory_space<vmem>>, vector<3x128xf32>,
    return
  }
  func.func @transform_0(%arg0: i32) -> (i32, i32) {
    %c0_i32 = arith.constant 0 : i32
    %c0_i32_0 = arith.constant 0 : i32
    %c0_i32_1 = arith.constant 0 : i32
    return %c0_i32, %c0_i32_0 : i32, i32
  }
  func.func @transform_1(%arg0: i32) -> (i32, i32) {
    %c0_i32 = arith.constant 0 : i32
    %c0_i32_0 = arith.constant 0 : i32
    %c0_i32_1 = arith.constant 0 : i32
    return %c0_i32, %c0_i32_0 : i32, i32
  }
  func.func @transform_2(%arg0: i32) -> (i32, i32) {
    %c0_i32 = arith.constant 0 : i32
    %c0_i32_0 = arith.constant 0 : i32
    %c0_i32_1 = arith.constant 0 : i32
    return %c0_i32, %c0_i32_0 : i32, i32
  }
  func.func @transform_3(%arg0: i32) -> (i32, i32) {
    %c0_i32 = arith.constant 0 : i32
    %c0_i32_0 = arith.constant 0 : i32
    %c0_i32_1 = arith.constant 0 : i32
    return %c0_i32, %c0_i32_0 : i32, i32
  }
  func.func @transform_4(%arg0: i32) -> (i32, i32) {
    %c0_i32 = arith.constant 0 : i32
    %c0_i32_0 = arith.constant 0 : i32
    return %c0_i32, %arg0 : i32, i32
  }
  func.func @transform_5(%arg0: i32) -> (i32, i32) {
    %c0_i32 = arith.constant 0 : i32
    %c0_i32_0 = arith.constant 0 : i32
    return %c0_i32, %arg0 : i32, i32
  }
}

</mosaic_0001>

<llo_original>
// kernel: dnn_forward.1
$region0: #{dnn_forward.1}
  #allocation0 [shape = 'u32[]', space=smem, size = 0x4, offset = 0x4, fixed_abs, tag = 'smem constant byte address 0x4 - core index']
  #allocation1 [shape = 'u32[144,128]{1,0:T(1,128)}', space=vmem, size = 0x12000, scoped, tag = 'internal scratch']
  %s0 = inlined_call_operand.vmem [shape: f32[10,2], index: 0, kind: input, shape index: {}]
  %s1 = inlined_call_operand.vmem [shape: f32[10,1], index: 1, kind: input, shape index: {}]
  %s2 = inlined_call_operand.vmem [shape: f32[3,10], index: 2, kind: input, shape index: {}]
  %s3 = inlined_call_operand.vmem [shape: f32[3,1], index: 3, kind: input, shape index: {}]
  %s4 = inlined_call_operand.vmem [shape: f32[2,128], index: 4, kind: input, shape index: {}]
  %s5 = inlined_call_operand.vmem [shape: f32[3,128], index: 5, kind: output, shape index: {}]
  %s6 = sld [smem:[#allocation0]]
  $region30: #{dnn_forward.1} parent=0
    _
  %s8 = ssub.s32 1, %s6
  %s9 = scalar_select 0, %s8, %s6
  // Predicated region
  $region2: #{dnn_forward.1} parent=0 // pred_check
    _
  $region3: #{dnn_forward.1} parent=0 // pred_check_branch
    %11 = sbr.rel (0) target = $region5
  $region4: #{dnn_forward.1} parent=0 // pred_region
    _
  $region5: #{dnn_forward.1} parent=0 // pred_fallthru
    _
  // Predicated region
  $region6: #{dnn_forward.1} parent=0 // pred_check
    _
  $region7: #{dnn_forward.1} parent=0 // pred_check_branch
    %13 = sbr.rel (0) target = $region9
  $region8: #{dnn_forward.1} parent=0 // pred_region
    _
  $region9: #{dnn_forward.1} parent=0 // pred_fallthru
    _
  // Predicated region
  $region10: #{dnn_forward.1} parent=0 // pred_check
    _
  $region11: #{dnn_forward.1} parent=0 // pred_check_branch
    %15 = sbr.rel (0) target = $region13
  $region12: #{dnn_forward.1} parent=0 // pred_region
    _
  $region13: #{dnn_forward.1} parent=0 // pred_fallthru
    _
  // Predicated region
  $region14: #{dnn_forward.1} parent=0 // pred_check
    _
  $region15: #{dnn_forward.1} parent=0 // pred_check_branch
    %17 = sbr.rel (0) target = $region17
  $region16: #{dnn_forward.1} parent=0 // pred_region
    _
  $region17: #{dnn_forward.1} parent=0 // pred_fallthru
    _
  // Predicated region
  $region18: #{dnn_forward.1} parent=0 // pred_check
    _
  $region19: #{dnn_forward.1} parent=0 // pred_check_branch
    %19 = sbr.rel (0) target = $region21
  $region20: #{dnn_forward.1} parent=0 // pred_region
    _
  $region21: #{dnn_forward.1} parent=0 // pred_fallthru
    _
  %v20 = vld [vmem:[%s4] sm:$0x3]
  %v21 = vld [vmem:[%s0] sm:$0xff]
  %v22 = vld [vmem:[%s0 + $0x8] sm:$0x3]
  %v23 = vld [vmem:[%s1] sm:$0xff]
  %v24 = vld [vmem:[%s1 + $0x8] sm:$0x3]
  %26 = vset.pattern.permute.xlu0 0
  %27 = vperm.xlu0 %26, %v23
  %v28 = vpop.permute.xlu0 %27
  %31 = vset.pattern.permute.xlu0 0
  %32 = vperm.xlu0 %31, %v24
  %v33 = vpop.permute.xlu0 %32
  %vm35 = vcmask 15360
  %v37 = vsel %vm35, %v21, 0
  %v40 = vsel %vm35, %v22, 0
  %vm42 = vcmask 1041408
  %v44 = vsel %vm42, %v20, 0
  %46 = vmatprep.subr.mxu0 0.0
  %47 = vmatpush1.msra.mxu0 0.0
  %48 = vmatprep.subr.mxu0 0.0
  %49 = vmatpush1.msra.mxu0 0.0
  %50 = vmatprep.subr.mxu0 0.0
  %51 = vmatpush1.msra.mxu0 0.0
  %52 = vmatprep.subr.mxu0 0.0
  %53 = vmatpush1.msra.mxu0 0.0
  %54 = vmatprep.subr.mxu0 0.0
  %55 = vmatpush1.msra.mxu0 0.0
  %56 = vmatprep.subr.mxu0 0.0
  %57 = vmatpush1.msra.mxu0 0.0
  %58 = vmatprep.subr.mxu0 0.0
  %59 = vmatpush1.msra.mxu0 0.0
  %60 = vmatprep.subr.mxu0 0.0
  %61 = vmatpush1.msra.mxu0 0.0
  %62 = vmatprep.subr.mxu0 0.0
  %63 = vmatpush1.msra.mxu0 0.0
  %64 = vmatprep.subr.mxu0 0.0
  %65 = vmatpush1.msra.mxu0 0.0
  %66 = vmatprep.subr.mxu0 0.0
  %67 = vmatpush1.msra.mxu0 0.0
  %68 = vmatprep.subr.mxu0 0.0
  %69 = vmatpush1.msra.mxu0 0.0
  %70 = vmatprep.subr.mxu0 0.0
  %71 = vmatpush1.msra.mxu0 0.0
  %72 = vmatprep.subr.mxu0 0.0
  %73 = vmatpush1.msra.mxu0 0.0
  %74 = vmatprep.subr.mxu0 0.0
  %75 = vmatpush1.msra.mxu0 0.0
  %76 = vmatprep.subr.mxu0 0.0
  %v77 = vand.u32 %v44, 4294901760
  %78 = vmatpush1.msra.mxu0 %v77
  %79 = vmatprep.subr.mxu0 0.0
  %80 = vmatpush2.msra.mxu0 0.0
  %81 = vmatprep.subr.mxu0 0.0
  %82 = vmatpush2.msra.mxu0 0.0
  %83 = vmatprep.subr.mxu0 0.0
  %84 = vmatpush2.msra.mxu0 0.0
  %85 = vmatprep.subr.mxu0 0.0
  %86 = vmatpush2.msra.mxu0 0.0
  %87 = vmatprep.subr.mxu0 0.0
  %88 = vmatpush2.msra.mxu0 0.0
  %89 = vmatprep.subr.mxu0 0.0
  %90 = vmatpush2.msra.mxu0 0.0
  %91 = vmatprep.subr.mxu0 0.0
  %92 = vmatpush2.msra.mxu0 0.0
  %93 = vmatprep.subr.mxu0 0.0
  %94 = vmatpush2.msra.mxu0 0.0
  %95 = vmatprep.subr.mxu0 0.0
  %96 = vmatpush2.msra.mxu0 0.0
  %97 = vmatprep.subr.mxu0 0.0
  %98 = vmatpush2.msra.mxu0 0.0
  %99 = vmatprep.subr.mxu0 0.0
  %100 = vmatpush2.msra.mxu0 0.0
  %101 = vmatprep.subr.mxu0 0.0
  %102 = vmatpush2.msra.mxu0 0.0
  %103 = vmatprep.subr.mxu0 0.0
  %104 = vmatpush2.msra.mxu0 0.0
  %105 = vmatprep.subr.mxu0 0.0
  %106 = vmatpush2.msra.mxu0 0.0
  %107 = vmatprep.subr.mxu0 0.0
  %108 = vmatpush2.msra.mxu0 0.0
  %109 = vmatprep.subr.mxu0 0.0
  %110 = vmatpush2.msra.mxu0 0.0
  %111 = vmatprep.mubr.f32.mxu0 0.0
  %v112 = vand.u32 %v37, 4294901760
  %v113 = vsub.f32 %v37, %v112
  %v114 = vand.u32 %v113, 4294901760
  %v115 = vsub.f32 %v113, %v114
  %v116 = vand.u32 %v115, 4294901760
  %117 = vmatmul.mubr.f32.gmra.mxu0 %v116
  %v118 = vpop.f32.mrf.mxu0
  %v119 = vadd.f32 %v28, %v118
  %v120 = vpop.f32.mrf.mxu0
  %121 = vmatprep.mubr.f32.mxu0 0.0
  %v122 = vand.u32 %v40, 4294901760
  %v123 = vsub.f32 %v40, %v122
  %v124 = vand.u32 %v123, 4294901760
  %v125 = vsub.f32 %v123, %v124
  %v126 = vand.u32 %v125, 4294901760
  %127 = vmatmul.mubr.f32.gmra.mxu0 %v126
  %v128 = vpop.f32.mrf.mxu0
  %v129 = vadd.f32 %v33, %v128
  %v130 = vpop.f32.mrf.mxu0
  %131 = vdwg.mxu0
  %132 = vmatprep.subr.mxu0 0.0
  %133 = vmatpush1.msra.mxu0 0.0
  %134 = vmatprep.subr.mxu0 0.0
  %135 = vmatpush1.msra.mxu0 0.0
  %136 = vmatprep.subr.mxu0 0.0
  %137 = vmatpush1.msra.mxu0 0.0
  %138 = vmatprep.subr.mxu0 0.0
  %139 = vmatpush1.msra.mxu0 0.0
  %140 = vmatprep.subr.mxu0 0.0
  %141 = vmatpush1.msra.mxu0 0.0
  %142 = vmatprep.subr.mxu0 0.0
  %143 = vmatpush1.msra.mxu0 0.0
  %144 = vmatprep.subr.mxu0 0.0
  %145 = vmatpush1.msra.mxu0 0.0
  %146 = vmatprep.subr.mxu0 0.0
  %147 = vmatpush1.msra.mxu0 0.0
  %148 = vmatprep.subr.mxu0 0.0
  %149 = vmatpush1.msra.mxu0 0.0
  %150 = vmatprep.subr.mxu0 0.0
  %151 = vmatpush1.msra.mxu0 0.0
  %152 = vmatprep.subr.mxu0 0.0
  %153 = vmatpush1.msra.mxu0 0.0
  %154 = vmatprep.subr.mxu0 0.0
  %155 = vmatpush1.msra.mxu0 0.0
  %156 = vmatprep.subr.mxu0 0.0
  %157 = vmatpush1.msra.mxu0 0.0
  %158 = vmatprep.subr.mxu0 0.0
  %159 = vmatpush1.msra.mxu0 0.0
  %160 = vmatprep.subr.mxu0 0.0
  %161 = vmatpush1.msra.mxu0 0.0
  %162 = vmatprep.subr.mxu0 0.0
  %v163 = vand.u32 %v44, 4294901760
  %v164 = vsub.f32 %v44, %v163
  %v165 = vand.u32 %v164, 4294901760
  %v166 = vsub.f32 %v164, %v165
  %v167 = vand.u32 %v166, 4294901760
  %168 = vmatpush1.msra.mxu0 %v167
  %169 = vmatprep.subr.mxu0 0.0
  %170 = vmatpush2.msra.mxu0 0.0
  %171 = vmatprep.subr.mxu0 0.0
  %172 = vmatpush2.msra.mxu0 0.0
  %173 = vmatprep.subr.mxu0 0.0
  %174 = vmatpush2.msra.mxu0 0.0
  %175 = vmatprep.subr.mxu0 0.0
  %176 = vmatpush2.msra.mxu0 0.0
  %177 = vmatprep.subr.mxu0 0.0
  %178 = vmatpush2.msra.mxu0 0.0
  %179 = vmatprep.subr.mxu0 0.0
  %180 = vmatpush2.msra.mxu0 0.0
  %181 = vmatprep.subr.mxu0 0.0
  %182 = vmatpush2.msra.mxu0 0.0
  %183 = vmatprep.subr.mxu0 0.0
  %184 = vmatpush2.msra.mxu0 0.0
  %185 = vmatprep.subr.mxu0 0.0
  %186 = vmatpush2.msra.mxu0 0.0
  %187 = vmatprep.subr.mxu0 0.0
  %188 = vmatpush2.msra.mxu0 0.0
  %189 = vmatprep.subr.mxu0 0.0
  %190 = vmatpush2.msra.mxu0 0.0
  %191 = vmatprep.subr.mxu0 0.0
  %192 = vmatpush2.msra.mxu0 0.0
  %193 = vmatprep.subr.mxu0 0.0
  %194 = vmatpush2.msra.mxu0 0.0
  %195 = vmatprep.subr.mxu0 0.0
  %196 = vmatpush2.msra.mxu0 0.0
  %197 = vmatprep.subr.mxu0 0.0
  %198 = vmatpush2.msra.mxu0 0.0
  %199 = vmatprep.subr.mxu0 0.0
  %200 = vmatpush2.msra.mxu0 0.0
  %201 = vmatprep.mubr.f32.mxu0 0.0
  %v202 = vand.u32 %v37, 4294901760
  %203 = vmatmul.mubr.f32.gmra.mxu0 %v202
  %v204 = vpop.f32.mrf.mxu0
  %v205 = vadd.f32 %v119, %v204
  %v206 = vpop.f32.mrf.mxu0
  %207 = vmatprep.mubr.f32.mxu0 0.0
  %v208 = vand.u32 %v40, 4294901760
  %209 = vmatmul.mubr.f32.gmra.mxu0 %v208
  %v210 = vpop.f32.mrf.mxu0
  %v211 = vadd.f32 %v129, %v210
  %v212 = vpop.f32.mrf.mxu0
  %213 = vdwg.mxu0
  %214 = vmatprep.subr.mxu0 0.0
  %215 = vmatpush1.msra.mxu0 0.0
  %216 = vmatprep.subr.mxu0 0.0
  %217 = vmatpush1.msra.mxu0 0.0
  %218 = vmatprep.subr.mxu0 0.0
  %219 = vmatpush1.msra.mxu0 0.0
  %220 = vmatprep.subr.mxu0 0.0
  %221 = vmatpush1.msra.mxu0 0.0
  %222 = vmatprep.subr.mxu0 0.0
  %223 = vmatpush1.msra.mxu0 0.0
  %224 = vmatprep.subr.mxu0 0.0
  %225 = vmatpush1.msra.mxu0 0.0
  %226 = vmatprep.subr.mxu0 0.0
  %227 = vmatpush1.msra.mxu0 0.0
  %228 = vmatprep.subr.mxu0 0.0
  %229 = vmatpush1.msra.mxu0 0.0
  %230 = vmatprep.subr.mxu0 0.0
  %231 = vmatpush1.msra.mxu0 0.0
  %232 = vmatprep.subr.mxu0 0.0
  %233 = vmatpush1.msra.mxu0 0.0
  %234 = vmatprep.subr.mxu0 0.0
  %235 = vmatpush1.msra.mxu0 0.0
  %236 = vmatprep.subr.mxu0 0.0
  %237 = vmatpush1.msra.mxu0 0.0
  %238 = vmatprep.subr.mxu0 0.0
  %239 = vmatpush1.msra.mxu0 0.0
  %240 = vmatprep.subr.mxu0 0.0
  %241 = vmatpush1.msra.mxu0 0.0
  %242 = vmatprep.subr.mxu0 0.0
  %243 = vmatpush1.msra.mxu0 0.0
  %244 = vmatprep.subr.mxu0 0.0
  %v245 = vand.u32 %v44, 4294901760
  %v246 = vsub.f32 %v44, %v245
  %247 = vmatpush1.msra.mxu0 %v246
  %248 = vmatprep.subr.mxu0 0.0
  %249 = vmatpush2.msra.mxu0 0.0
  %250 = vmatprep.subr.mxu0 0.0
  %251 = vmatpush2.msra.mxu0 0.0
  %252 = vmatprep.subr.mxu0 0.0
  %253 = vmatpush2.msra.mxu0 0.0
  %254 = vmatprep.subr.mxu0 0.0
  %255 = vmatpush2.msra.mxu0 0.0
  %256 = vmatprep.subr.mxu0 0.0
  %257 = vmatpush2.msra.mxu0 0.0
  %258 = vmatprep.subr.mxu0 0.0
  %259 = vmatpush2.msra.mxu0 0.0
  %260 = vmatprep.subr.mxu0 0.0
  %261 = vmatpush2.msra.mxu0 0.0
  %262 = vmatprep.subr.mxu0 0.0
  %263 = vmatpush2.msra.mxu0 0.0
  %264 = vmatprep.subr.mxu0 0.0
  %265 = vmatpush2.msra.mxu0 0.0
  %266 = vmatprep.subr.mxu0 0.0
  %267 = vmatpush2.msra.mxu0 0.0
  %268 = vmatprep.subr.mxu0 0.0
  %269 = vmatpush2.msra.mxu0 0.0
  %270 = vmatprep.subr.mxu0 0.0
  %271 = vmatpush2.msra.mxu0 0.0
  %272 = vmatprep.subr.mxu0 0.0
  %273 = vmatpush2.msra.mxu0 0.0
  %274 = vmatprep.subr.mxu0 0.0
  %275 = vmatpush2.msra.mxu0 0.0
  %276 = vmatprep.subr.mxu0 0.0
  %277 = vmatpush2.msra.mxu0 0.0
  %278 = vmatprep.subr.mxu0 0.0
  %279 = vmatpush2.msra.mxu0 0.0
  %280 = vmatprep.mubr.f32.mxu0 0.0
  %v281 = vand.u32 %v37, 4294901760
  %v282 = vsub.f32 %v37, %v281
  %283 = vmatmul.mubr.f32.gmra.mxu0 %v282
  %v284 = vpop.f32.mrf.mxu0
  %v285 = vadd.f32 %v205, %v284
  %v286 = vpop.f32.mrf.mxu0
  %287 = vmatprep.mubr.f32.mxu0 0.0
  %v288 = vand.u32 %v40, 4294901760
  %v289 = vsub.f32 %v40, %v288
  %290 = vmatmul.mubr.f32.gmra.mxu0 %v289
  %v291 = vpop.f32.mrf.mxu0
  %v292 = vadd.f32 %v211, %v291
  %v293 = vpop.f32.mrf.mxu0
  %294 = vdwg.mxu0
  %295 = vmatprep.subr.mxu0 0.0
  %296 = vmatpush1.msra.mxu0 0.0
  %297 = vmatprep.subr.mxu0 0.0
  %298 = vmatpush1.msra.mxu0 0.0
  %299 = vmatprep.subr.mxu0 0.0
  %300 = vmatpush1.msra.mxu0 0.0
  %301 = vmatprep.subr.mxu0 0.0
  %302 = vmatpush1.msra.mxu0 0.0
  %303 = vmatprep.subr.mxu0 0.0
  %304 = vmatpush1.msra.mxu0 0.0
  %305 = vmatprep.subr.mxu0 0.0
  %306 = vmatpush1.msra.mxu0 0.0
  %307 = vmatprep.subr.mxu0 0.0
  %308 = vmatpush1.msra.mxu0 0.0
  %309 = vmatprep.subr.mxu0 0.0
  %310 = vmatpush1.msra.mxu0 0.0
  %311 = vmatprep.subr.mxu0 0.0
  %312 = vmatpush1.msra.mxu0 0.0
  %313 = vmatprep.subr.mxu0 0.0
  %314 = vmatpush1.msra.mxu0 0.0
  %315 = vmatprep.subr.mxu0 0.0
  %316 = vmatpush1.msra.mxu0 0.0
  %317 = vmatprep.subr.mxu0 0.0
  %318 = vmatpush1.msra.mxu0 0.0
  %319 = vmatprep.subr.mxu0 0.0
  %320 = vmatpush1.msra.mxu0 0.0
  %321 = vmatprep.subr.mxu0 0.0
  %322 = vmatpush1.msra.mxu0 0.0
  %323 = vmatprep.subr.mxu0 0.0
  %324 = vmatpush1.msra.mxu0 0.0
  %325 = vmatprep.subr.mxu0 0.0
  %v326 = vand.u32 %v44, 4294901760
  %327 = vmatpush1.msra.mxu0 %v326
  %328 = vmatprep.subr.mxu0 0.0
  %329 = vmatpush2.msra.mxu0 0.0
  %330 = vmatprep.subr.mxu0 0.0
  %331 = vmatpush2.msra.mxu0 0.0
  %332 = vmatprep.subr.mxu0 0.0
  %333 = vmatpush2.msra.mxu0 0.0
  %334 = vmatprep.subr.mxu0 0.0
  %335 = vmatpush2.msra.mxu0 0.0
  %336 = vmatprep.subr.mxu0 0.0
  %337 = vmatpush2.msra.mxu0 0.0
  %338 = vmatprep.subr.mxu0 0.0
  %339 = vmatpush2.msra.mxu0 0.0
  %340 = vmatprep.subr.mxu0 0.0
  %341 = vmatpush2.msra.mxu0 0.0
  %342 = vmatprep.subr.mxu0 0.0
  %343 = vmatpush2.msra.mxu0 0.0
  %344 = vmatprep.subr.mxu0 0.0
  %345 = vmatpush2.msra.mxu0 0.0
  %346 = vmatprep.subr.mxu0 0.0
  %347 = vmatpush2.msra.mxu0 0.0
  %348 = vmatprep.subr.mxu0 0.0
  %349 = vmatpush2.msra.mxu0 0.0
  %350 = vmatprep.subr.mxu0 0.0
  %351 = vmatpush2.msra.mxu0 0.0
  %352 = vmatprep.subr.mxu0 0.0
  %353 = vmatpush2.msra.mxu0 0.0
  %354 = vmatprep.subr.mxu0 0.0
  %355 = vmatpush2.msra.mxu0 0.0
  %356 = vmatprep.subr.mxu0 0.0
  %357 = vmatpush2.msra.mxu0 0.0
  %358 = vmatprep.subr.mxu0 0.0
  %359 = vmatpush2.msra.mxu0 0.0
  %360 = vmatprep.mubr.f32.mxu0 0.0
  %v361 = vand.u32 %v37, 4294901760
  %v362 = vsub.f32 %v37, %v361
  %v363 = vand.u32 %v362, 4294901760
  %364 = vmatmul.mubr.f32.gmra.mxu0 %v363
  %v365 = vpop.f32.mrf.mxu0
  %v366 = vadd.f32 %v285, %v365
  %v367 = vpop.f32.mrf.mxu0
  %368 = vmatprep.mubr.f32.mxu0 0.0
  %v369 = vand.u32 %v40, 4294901760
  %v370 = vsub.f32 %v40, %v369
  %v371 = vand.u32 %v370, 4294901760
  %372 = vmatmul.mubr.f32.gmra.mxu0 %v371
  %v373 = vpop.f32.mrf.mxu0
  %v374 = vadd.f32 %v292, %v373
  %v375 = vpop.f32.mrf.mxu0
  %376 = vdwg.mxu0
  %377 = vmatprep.subr.mxu0 0.0
  %378 = vmatpush1.msra.mxu0 0.0
  %379 = vmatprep.subr.mxu0 0.0
  %380 = vmatpush1.msra.mxu0 0.0
  %381 = vmatprep.subr.mxu0 0.0
  %382 = vmatpush1.msra.mxu0 0.0
  %383 = vmatprep.subr.mxu0 0.0
  %384 = vmatpush1.msra.mxu0 0.0
  %385 = vmatprep.subr.mxu0 0.0
  %386 = vmatpush1.msra.mxu0 0.0
  %387 = vmatprep.subr.mxu0 0.0
  %388 = vmatpush1.msra.mxu0 0.0
  %389 = vmatprep.subr.mxu0 0.0
  %390 = vmatpush1.msra.mxu0 0.0
  %391 = vmatprep.subr.mxu0 0.0
  %392 = vmatpush1.msra.mxu0 0.0
  %393 = vmatprep.subr.mxu0 0.0
  %394 = vmatpush1.msra.mxu0 0.0
  %395 = vmatprep.subr.mxu0 0.0
  %396 = vmatpush1.msra.mxu0 0.0
  %397 = vmatprep.subr.mxu0 0.0
  %398 = vmatpush1.msra.mxu0 0.0
  %399 = vmatprep.subr.mxu0 0.0
  %400 = vmatpush1.msra.mxu0 0.0
  %401 = vmatprep.subr.mxu0 0.0
  %402 = vmatpush1.msra.mxu0 0.0
  %403 = vmatprep.subr.mxu0 0.0
  %404 = vmatpush1.msra.mxu0 0.0
  %405 = vmatprep.subr.mxu0 0.0
  %406 = vmatpush1.msra.mxu0 0.0
  %407 = vmatprep.subr.mxu0 0.0
  %v408 = vand.u32 %v44, 4294901760
  %v409 = vsub.f32 %v44, %v408
  %v410 = vand.u32 %v409, 4294901760
  %411 = vmatpush1.msra.mxu0 %v410
  %412 = vmatprep.subr.mxu0 0.0
  %413 = vmatpush2.msra.mxu0 0.0
  %414 = vmatprep.subr.mxu0 0.0
  %415 = vmatpush2.msra.mxu0 0.0
  %416 = vmatprep.subr.mxu0 0.0
  %417 = vmatpush2.msra.mxu0 0.0
  %418 = vmatprep.subr.mxu0 0.0
  %419 = vmatpush2.msra.mxu0 0.0
  %420 = vmatprep.subr.mxu0 0.0
  %421 = vmatpush2.msra.mxu0 0.0
  %422 = vmatprep.subr.mxu0 0.0
  %423 = vmatpush2.msra.mxu0 0.0
  %424 = vmatprep.subr.mxu0 0.0
  %425 = vmatpush2.msra.mxu0 0.0
  %426 = vmatprep.subr.mxu0 0.0
  %427 = vmatpush2.msra.mxu0 0.0
  %428 = vmatprep.subr.mxu0 0.0
  %429 = vmatpush2.msra.mxu0 0.0
  %430 = vmatprep.subr.mxu0 0.0
  %431 = vmatpush2.msra.mxu0 0.0
  %432 = vmatprep.subr.mxu0 0.0
  %433 = vmatpush2.msra.mxu0 0.0
  %434 = vmatprep.subr.mxu0 0.0
  %435 = vmatpush2.msra.mxu0 0.0
  %436 = vmatprep.subr.mxu0 0.0
  %437 = vmatpush2.msra.mxu0 0.0
  %438 = vmatprep.subr.mxu0 0.0
  %439 = vmatpush2.msra.mxu0 0.0
  %440 = vmatprep.subr.mxu0 0.0
  %441 = vmatpush2.msra.mxu0 0.0
  %442 = vmatprep.subr.mxu0 0.0
  %443 = vmatpush2.msra.mxu0 0.0
  %444 = vmatprep.mubr.f32.mxu0 0.0
  %v445 = vand.u32 %v37, 4294901760
  %446 = vmatmul.mubr.f32.gmra.mxu0 %v445
  %v447 = vpop.f32.mrf.mxu0
  %v448 = vadd.f32 %v366, %v447
  %v449 = vpop.f32.mrf.mxu0
  %450 = vmatprep.mubr.f32.mxu0 0.0
  %v451 = vand.u32 %v40, 4294901760
  %452 = vmatmul.mubr.f32.gmra.mxu0 %v451
  %v453 = vpop.f32.mrf.mxu0
  %v454 = vadd.f32 %v374, %v453
  %v455 = vpop.f32.mrf.mxu0
  %456 = vdwg.mxu0
  %457 = vmatprep.subr.mxu0 0.0
  %458 = vmatpush1.msra.mxu0 0.0
  %459 = vmatprep.subr.mxu0 0.0
  %460 = vmatpush1.msra.mxu0 0.0
  %461 = vmatprep.subr.mxu0 0.0
  %462 = vmatpush1.msra.mxu0 0.0
  %463 = vmatprep.subr.mxu0 0.0
  %464 = vmatpush1.msra.mxu0 0.0
  %465 = vmatprep.subr.mxu0 0.0
  %466 = vmatpush1.msra.mxu0 0.0
  %467 = vmatprep.subr.mxu0 0.0
  %468 = vmatpush1.msra.mxu0 0.0
  %469 = vmatprep.subr.mxu0 0.0
  %470 = vmatpush1.msra.mxu0 0.0
  %471 = vmatprep.subr.mxu0 0.0
  %472 = vmatpush1.msra.mxu0 0.0
  %473 = vmatprep.subr.mxu0 0.0
  %474 = vmatpush1.msra.mxu0 0.0
  %475 = vmatprep.subr.mxu0 0.0
  %476 = vmatpush1.msra.mxu0 0.0
  %477 = vmatprep.subr.mxu0 0.0
  %478 = vmatpush1.msra.mxu0 0.0
  %479 = vmatprep.subr.mxu0 0.0
  %480 = vmatpush1.msra.mxu0 0.0
  %481 = vmatprep.subr.mxu0 0.0
  %482 = vmatpush1.msra.mxu0 0.0
  %483 = vmatprep.subr.mxu0 0.0
  %484 = vmatpush1.msra.mxu0 0.0
  %485 = vmatprep.subr.mxu0 0.0
  %486 = vmatpush1.msra.mxu0 0.0
  %487 = vmatprep.subr.mxu0 0.0
  %v488 = vand.u32 %v44, 4294901760
  %489 = vmatpush1.msra.mxu0 %v488
  %490 = vmatprep.subr.mxu0 0.0
  %491 = vmatpush2.msra.mxu0 0.0
  %492 = vmatprep.subr.mxu0 0.0
  %493 = vmatpush2.msra.mxu0 0.0
  %494 = vmatprep.subr.mxu0 0.0
  %495 = vmatpush2.msra.mxu0 0.0
  %496 = vmatprep.subr.mxu0 0.0
  %497 = vmatpush2.msra.mxu0 0.0
  %498 = vmatprep.subr.mxu0 0.0
  %499 = vmatpush2.msra.mxu0 0.0
  %500 = vmatprep.subr.mxu0 0.0
  %501 = vmatpush2.msra.mxu0 0.0
  %502 = vmatprep.subr.mxu0 0.0
  %503 = vmatpush2.msra.mxu0 0.0
  %504 = vmatprep.subr.mxu0 0.0
  %505 = vmatpush2.msra.mxu0 0.0
  %506 = vmatprep.subr.mxu0 0.0
  %507 = vmatpush2.msra.mxu0 0.0
  %508 = vmatprep.subr.mxu0 0.0
  %509 = vmatpush2.msra.mxu0 0.0
  %510 = vmatprep.subr.mxu0 0.0
  %511 = vmatpush2.msra.mxu0 0.0
  %512 = vmatprep.subr.mxu0 0.0
  %513 = vmatpush2.msra.mxu0 0.0
  %514 = vmatprep.subr.mxu0 0.0
  %515 = vmatpush2.msra.mxu0 0.0
  %516 = vmatprep.subr.mxu0 0.0
  %517 = vmatpush2.msra.mxu0 0.0
  %518 = vmatprep.subr.mxu0 0.0
  %519 = vmatpush2.msra.mxu0 0.0
  %520 = vmatprep.subr.mxu0 0.0
  %521 = vmatpush2.msra.mxu0 0.0
  %522 = vmatprep.mubr.f32.mxu0 0.0
  %v523 = vand.u32 %v37, 4294901760
  %524 = vmatmul.mubr.f32.gmra.mxu0 %v523
  %v525 = vpop.f32.mrf.mxu0
  %v526 = vadd.f32 %v448, %v525
  %v527 = vpop.f32.mrf.mxu0
  %528 = vmatprep.mubr.f32.mxu0 0.0
  %v529 = vand.u32 %v40, 4294901760
  %530 = vmatmul.mubr.f32.gmra.mxu0 %v529
  %v531 = vpop.f32.mrf.mxu0
  %v532 = vadd.f32 %v454, %v531
  %v533 = vpop.f32.mrf.mxu0
  %534 = vdwg.mxu0
  %v535 = vmax.f32 %v526, 0.0
  %v536 = vmax.f32 %v532, 0.0
  %v537 = vld [vmem:[%s2] sm:$0x7]
  %v538 = vld [vmem:[%s3] sm:$0x7]
  %540 = vset.pattern.permute.xlu0 0
  %541 = vperm.xlu0 %540, %v538
  %v542 = vpop.permute.xlu0 %541
  %vm544 = vcmask 80896
  %v546 = vsel %vm544, %v537, 0
  %v549 = vsel %vm42, %v536, 0
  %551 = vmatprep.subr.mxu0 0.0
  %552 = vmatpush1.msra.mxu0 0.0
  %553 = vmatprep.subr.mxu0 0.0
  %554 = vmatpush1.msra.mxu0 0.0
  %555 = vmatprep.subr.mxu0 0.0
  %556 = vmatpush1.msra.mxu0 0.0
  %557 = vmatprep.subr.mxu0 0.0
  %558 = vmatpush1.msra.mxu0 0.0
  %559 = vmatprep.subr.mxu0 0.0
  %560 = vmatpush1.msra.mxu0 0.0
  %561 = vmatprep.subr.mxu0 0.0
  %562 = vmatpush1.msra.mxu0 0.0
  %563 = vmatprep.subr.mxu0 0.0
  %564 = vmatpush1.msra.mxu0 0.0
  %565 = vmatprep.subr.mxu0 0.0
  %566 = vmatpush1.msra.mxu0 0.0
  %567 = vmatprep.subr.mxu0 0.0
  %568 = vmatpush1.msra.mxu0 0.0
  %569 = vmatprep.subr.mxu0 0.0
  %570 = vmatpush1.msra.mxu0 0.0
  %571 = vmatprep.subr.mxu0 0.0
  %572 = vmatpush1.msra.mxu0 0.0
  %573 = vmatprep.subr.mxu0 0.0
  %574 = vmatpush1.msra.mxu0 0.0
  %575 = vmatprep.subr.mxu0 0.0
  %576 = vmatpush1.msra.mxu0 0.0
  %577 = vmatprep.subr.mxu0 0.0
  %578 = vmatpush1.msra.mxu0 0.0
  %579 = vmatprep.subr.mxu0 0.0
  %v580 = vand.u32 %v549, 4294901760
  %581 = vmatpush1.msra.mxu0 %v580
  %582 = vmatprep.subr.mxu0 0.0
  %v583 = vand.u32 %v535, 4294901760
  %584 = vmatpush1.msra.mxu0 %v583
  %585 = vmatprep.subr.mxu0 0.0
  %586 = vmatpush2.msra.mxu0 0.0
  %587 = vmatprep.subr.mxu0 0.0
  %588 = vmatpush2.msra.mxu0 0.0
  %589 = vmatprep.subr.mxu0 0.0
  %590 = vmatpush2.msra.mxu0 0.0
  %591 = vmatprep.subr.mxu0 0.0
  %592 = vmatpush2.msra.mxu0 0.0
  %593 = vmatprep.subr.mxu0 0.0
  %594 = vmatpush2.msra.mxu0 0.0
  %595 = vmatprep.subr.mxu0 0.0
  %596 = vmatpush2.msra.mxu0 0.0
  %597 = vmatprep.subr.mxu0 0.0
  %598 = vmatpush2.msra.mxu0 0.0
  %599 = vmatprep.subr.mxu0 0.0
  %600 = vmatpush2.msra.mxu0 0.0
  %601 = vmatprep.subr.mxu0 0.0
  %602 = vmatpush2.msra.mxu0 0.0
  %603 = vmatprep.subr.mxu0 0.0
  %604 = vmatpush2.msra.mxu0 0.0
  %605 = vmatprep.subr.mxu0 0.0
  %606 = vmatpush2.msra.mxu0 0.0
  %607 = vmatprep.subr.mxu0 0.0
  %608 = vmatpush2.msra.mxu0 0.0
  %609 = vmatprep.subr.mxu0 0.0
  %610 = vmatpush2.msra.mxu0 0.0
  %611 = vmatprep.subr.mxu0 0.0
  %612 = vmatpush2.msra.mxu0 0.0
  %613 = vmatprep.subr.mxu0 0.0
  %614 = vmatpush2.msra.mxu0 0.0
  %615 = vmatprep.subr.mxu0 0.0
  %616 = vmatpush2.msra.mxu0 0.0
  %617 = vmatprep.mubr.f32.mxu0 0.0
  %v618 = vand.u32 %v546, 4294901760
  %v619 = vsub.f32 %v546, %v618
  %v620 = vand.u32 %v619, 4294901760
  %v621 = vsub.f32 %v619, %v620
  %v622 = vand.u32 %v621, 4294901760
  %623 = vmatmul.mubr.f32.gmra.mxu0 %v622
  %v624 = vpop.f32.mrf.mxu0
  %v625 = vadd.f32 %v542, %v624
  %v626 = vpop.f32.mrf.mxu0
  %627 = vdwg.mxu0
  %628 = vmatprep.subr.mxu0 0.0
  %629 = vmatpush1.msra.mxu0 0.0
  %630 = vmatprep.subr.mxu0 0.0
  %631 = vmatpush1.msra.mxu0 0.0
  %632 = vmatprep.subr.mxu0 0.0
  %633 = vmatpush1.msra.mxu0 0.0
  %634 = vmatprep.subr.mxu0 0.0
  %635 = vmatpush1.msra.mxu0 0.0
  %636 = vmatprep.subr.mxu0 0.0
  %637 = vmatpush1.msra.mxu0 0.0
  %638 = vmatprep.subr.mxu0 0.0
  %639 = vmatpush1.msra.mxu0 0.0
  %640 = vmatprep.subr.mxu0 0.0
  %641 = vmatpush1.msra.mxu0 0.0
  %642 = vmatprep.subr.mxu0 0.0
  %643 = vmatpush1.msra.mxu0 0.0
  %644 = vmatprep.subr.mxu0 0.0
  %645 = vmatpush1.msra.mxu0 0.0
  %646 = vmatprep.subr.mxu0 0.0
  %647 = vmatpush1.msra.mxu0 0.0
  %648 = vmatprep.subr.mxu0 0.0
  %649 = vmatpush1.msra.mxu0 0.0
  %650 = vmatprep.subr.mxu0 0.0
  %651 = vmatpush1.msra.mxu0 0.0
  %652 = vmatprep.subr.mxu0 0.0
  %653 = vmatpush1.msra.mxu0 0.0
  %654 = vmatprep.subr.mxu0 0.0
  %655 = vmatpush1.msra.mxu0 0.0
  %656 = vmatprep.subr.mxu0 0.0
  %v657 = vand.u32 %v549, 4294901760
  %v658 = vsub.f32 %v549, %v657
  %v659 = vand.u32 %v658, 4294901760
  %v660 = vsub.f32 %v658, %v659
  %v661 = vand.u32 %v660, 4294901760
  %662 = vmatpush1.msra.mxu0 %v661
  %663 = vmatprep.subr.mxu0 0.0
  %v664 = vand.u32 %v535, 4294901760
  %v665 = vsub.f32 %v535, %v664
  %v666 = vand.u32 %v665, 4294901760
  %v667 = vsub.f32 %v665, %v666
  %v668 = vand.u32 %v667, 4294901760
  %669 = vmatpush1.msra.mxu0 %v668
  %670 = vmatprep.subr.mxu0 0.0
  %671 = vmatpush2.msra.mxu0 0.0
  %672 = vmatprep.subr.mxu0 0.0
  %673 = vmatpush2.msra.mxu0 0.0
  %674 = vmatprep.subr.mxu0 0.0
  %675 = vmatpush2.msra.mxu0 0.0
  %676 = vmatprep.subr.mxu0 0.0
  %677 = vmatpush2.msra.mxu0 0.0
  %678 = vmatprep.subr.mxu0 0.0
  %679 = vmatpush2.msra.mxu0 0.0
  %680 = vmatprep.subr.mxu0 0.0
  %681 = vmatpush2.msra.mxu0 0.0
  %682 = vmatprep.subr.mxu0 0.0
  %683 = vmatpush2.msra.mxu0 0.0
  %684 = vmatprep.subr.mxu0 0.0
  %685 = vmatpush2.msra.mxu0 0.0
  %686 = vmatprep.subr.mxu0 0.0
  %687 = vmatpush2.msra.mxu0 0.0
  %688 = vmatprep.subr.mxu0 0.0
  %689 = vmatpush2.msra.mxu0 0.0
  %690 = vmatprep.subr.mxu0 0.0
  %691 = vmatpush2.msra.mxu0 0.0
  %692 = vmatprep.subr.mxu0 0.0
  %693 = vmatpush2.msra.mxu0 0.0
  %694 = vmatprep.subr.mxu0 0.0
  %695 = vmatpush2.msra.mxu0 0.0
  %696 = vmatprep.subr.mxu0 0.0
  %697 = vmatpush2.msra.mxu0 0.0
  %698 = vmatprep.subr.mxu0 0.0
  %699 = vmatpush2.msra.mxu0 0.0
  %700 = vmatprep.subr.mxu0 0.0
  %701 = vmatpush2.msra.mxu0 0.0
  %702 = vmatprep.mubr.f32.mxu0 0.0
  %v703 = vand.u32 %v546, 4294901760
  %704 = vmatmul.mubr.f32.gmra.mxu0 %v703
  %v705 = vpop.f32.mrf.mxu0
  %v706 = vadd.f32 %v625, %v705
  %v707 = vpop.f32.mrf.mxu0
  %708 = vdwg.mxu0
  %709 = vmatprep.subr.mxu0 0.0
  %710 = vmatpush1.msra.mxu0 0.0
  %711 = vmatprep.subr.mxu0 0.0
  %712 = vmatpush1.msra.mxu0 0.0
  %713 = vmatprep.subr.mxu0 0.0
  %714 = vmatpush1.msra.mxu0 0.0
  %715 = vmatprep.subr.mxu0 0.0
  %716 = vmatpush1.msra.mxu0 0.0
  %717 = vmatprep.subr.mxu0 0.0
  %718 = vmatpush1.msra.mxu0 0.0
  %719 = vmatprep.subr.mxu0 0.0
  %720 = vmatpush1.msra.mxu0 0.0
  %721 = vmatprep.subr.mxu0 0.0
  %722 = vmatpush1.msra.mxu0 0.0
  %723 = vmatprep.subr.mxu0 0.0
  %724 = vmatpush1.msra.mxu0 0.0
  %725 = vmatprep.subr.mxu0 0.0
  %726 = vmatpush1.msra.mxu0 0.0
  %727 = vmatprep.subr.mxu0 0.0
  %728 = vmatpush1.msra.mxu0 0.0
  %729 = vmatprep.subr.mxu0 0.0
  %730 = vmatpush1.msra.mxu0 0.0
  %731 = vmatprep.subr.mxu0 0.0
  %732 = vmatpush1.msra.mxu0 0.0
  %733 = vmatprep.subr.mxu0 0.0
  %734 = vmatpush1.msra.mxu0 0.0
  %735 = vmatprep.subr.mxu0 0.0
  %736 = vmatpush1.msra.mxu0 0.0
  %737 = vmatprep.subr.mxu0 0.0
  %v738 = vand.u32 %v549, 4294901760
  %v739 = vsub.f32 %v549, %v738
  %740 = vmatpush1.msra.mxu0 %v739
  %741 = vmatprep.subr.mxu0 0.0
  %v742 = vand.u32 %v535, 4294901760
  %v743 = vsub.f32 %v535, %v742
  %744 = vmatpush1.msra.mxu0 %v743
  %745 = vmatprep.subr.mxu0 0.0
  %746 = vmatpush2.msra.mxu0 0.0
  %747 = vmatprep.subr.mxu0 0.0
  %748 = vmatpush2.msra.mxu0 0.0
  %749 = vmatprep.subr.mxu0 0.0
  %750 = vmatpush2.msra.mxu0 0.0
  %751 = vmatprep.subr.mxu0 0.0
  %752 = vmatpush2.msra.mxu0 0.0
  %753 = vmatprep.subr.mxu0 0.0
  %754 = vmatpush2.msra.mxu0 0.0
  %755 = vmatprep.subr.mxu0 0.0
  %756 = vmatpush2.msra.mxu0 0.0
  %757 = vmatprep.subr.mxu0 0.0
  %758 = vmatpush2.msra.mxu0 0.0
  %759 = vmatprep.subr.mxu0 0.0
  %760 = vmatpush2.msra.mxu0 0.0
  %761 = vmatprep.subr.mxu0 0.0
  %762 = vmatpush2.msra.mxu0 0.0
  %763 = vmatprep.subr.mxu0 0.0
  %764 = vmatpush2.msra.mxu0 0.0
  %765 = vmatprep.subr.mxu0 0.0
  %766 = vmatpush2.msra.mxu0 0.0
  %767 = vmatprep.subr.mxu0 0.0
  %768 = vmatpush2.msra.mxu0 0.0
  %769 = vmatprep.subr.mxu0 0.0
  %770 = vmatpush2.msra.mxu0 0.0
  %771 = vmatprep.subr.mxu0 0.0
  %772 = vmatpush2.msra.mxu0 0.0
  %773 = vmatprep.subr.mxu0 0.0
  %774 = vmatpush2.msra.mxu0 0.0
  %775 = vmatprep.subr.mxu0 0.0
  %776 = vmatpush2.msra.mxu0 0.0
  %777 = vmatprep.mubr.f32.mxu0 0.0
  %v778 = vand.u32 %v546, 4294901760
  %v779 = vsub.f32 %v546, %v778
  %780 = vmatmul.mubr.f32.gmra.mxu0 %v779
  %v781 = vpop.f32.mrf.mxu0
  %v782 = vadd.f32 %v706, %v781
  %v783 = vpop.f32.mrf.mxu0
  %784 = vdwg.mxu0
  %785 = vmatprep.subr.mxu0 0.0
  %786 = vmatpush1.msra.mxu0 0.0
  %787 = vmatprep.subr.mxu0 0.0
  %788 = vmatpush1.msra.mxu0 0.0
  %789 = vmatprep.subr.mxu0 0.0
  %790 = vmatpush1.msra.mxu0 0.0
  %791 = vmatprep.subr.mxu0 0.0
  %792 = vmatpush1.msra.mxu0 0.0
  %793 = vmatprep.subr.mxu0 0.0
  %794 = vmatpush1.msra.mxu0 0.0
  %795 = vmatprep.subr.mxu0 0.0
  %796 = vmatpush1.msra.mxu0 0.0
  %797 = vmatprep.subr.mxu0 0.0
  %798 = vmatpush1.msra.mxu0 0.0
  %799 = vmatprep.subr.mxu0 0.0
  %800 = vmatpush1.msra.mxu0 0.0
  %801 = vmatprep.subr.mxu0 0.0
  %802 = vmatpush1.msra.mxu0 0.0
  %803 = vmatprep.subr.mxu0 0.0
  %804 = vmatpush1.msra.mxu0 0.0
  %805 = vmatprep.subr.mxu0 0.0
  %806 = vmatpush1.msra.mxu0 0.0
  %807 = vmatprep.subr.mxu0 0.0
  %808 = vmatpush1.msra.mxu0 0.0
  %809 = vmatprep.subr.mxu0 0.0
  %810 = vmatpush1.msra.mxu0 0.0
  %811 = vmatprep.subr.mxu0 0.0
  %812 = vmatpush1.msra.mxu0 0.0
  %813 = vmatprep.subr.mxu0 0.0
  %v814 = vand.u32 %v549, 4294901760
  %815 = vmatpush1.msra.mxu0 %v814
  %816 = vmatprep.subr.mxu0 0.0
  %v817 = vand.u32 %v535, 4294901760
  %818 = vmatpush1.msra.mxu0 %v817
  %819 = vmatprep.subr.mxu0 0.0
  %820 = vmatpush2.msra.mxu0 0.0
  %821 = vmatprep.subr.mxu0 0.0
  %822 = vmatpush2.msra.mxu0 0.0
  %823 = vmatprep.subr.mxu0 0.0
  %824 = vmatpush2.msra.mxu0 0.0
  %825 = vmatprep.subr.mxu0 0.0
  %826 = vmatpush2.msra.mxu0 0.0
  %827 = vmatprep.subr.mxu0 0.0
  %828 = vmatpush2.msra.mxu0 0.0
  %829 = vmatprep.subr.mxu0 0.0
  %830 = vmatpush2.msra.mxu0 0.0
  %831 = vmatprep.subr.mxu0 0.0
  %832 = vmatpush2.msra.mxu0 0.0
  %833 = vmatprep.subr.mxu0 0.0
  %834 = vmatpush2.msra.mxu0 0.0
  %835 = vmatprep.subr.mxu0 0.0
  %836 = vmatpush2.msra.mxu0 0.0
  %837 = vmatprep.subr.mxu0 0.0
  %838 = vmatpush2.msra.mxu0 0.0
  %839 = vmatprep.subr.mxu0 0.0
  %840 = vmatpush2.msra.mxu0 0.0
  %841 = vmatprep.subr.mxu0 0.0
  %842 = vmatpush2.msra.mxu0 0.0
  %843 = vmatprep.subr.mxu0 0.0
  %844 = vmatpush2.msra.mxu0 0.0
  %845 = vmatprep.subr.mxu0 0.0
  %846 = vmatpush2.msra.mxu0 0.0
  %847 = vmatprep.subr.mxu0 0.0
  %848 = vmatpush2.msra.mxu0 0.0
  %849 = vmatprep.subr.mxu0 0.0
  %850 = vmatpush2.msra.mxu0 0.0
  %851 = vmatprep.mubr.f32.mxu0 0.0
  %v852 = vand.u32 %v546, 4294901760
  %v853 = vsub.f32 %v546, %v852
  %v854 = vand.u32 %v853, 4294901760
  %855 = vmatmul.mubr.f32.gmra.mxu0 %v854
  %v856 = vpop.f32.mrf.mxu0
  %v857 = vadd.f32 %v782, %v856
  %v858 = vpop.f32.mrf.mxu0
  %859 = vdwg.mxu0
  %860 = vmatprep.subr.mxu0 0.0
  %861 = vmatpush1.msra.mxu0 0.0
  %862 = vmatprep.subr.mxu0 0.0
  %863 = vmatpush1.msra.mxu0 0.0
  %864 = vmatprep.subr.mxu0 0.0
  %865 = vmatpush1.msra.mxu0 0.0
  %866 = vmatprep.subr.mxu0 0.0
  %867 = vmatpush1.msra.mxu0 0.0
  %868 = vmatprep.subr.mxu0 0.0
  %869 = vmatpush1.msra.mxu0 0.0
  %870 = vmatprep.subr.mxu0 0.0
  %871 = vmatpush1.msra.mxu0 0.0
  %872 = vmatprep.subr.mxu0 0.0
  %873 = vmatpush1.msra.mxu0 0.0
  %874 = vmatprep.subr.mxu0 0.0
  %875 = vmatpush1.msra.mxu0 0.0
  %876 = vmatprep.subr.mxu0 0.0
  %877 = vmatpush1.msra.mxu0 0.0
  %878 = vmatprep.subr.mxu0 0.0
  %879 = vmatpush1.msra.mxu0 0.0
  %880 = vmatprep.subr.mxu0 0.0
  %881 = vmatpush1.msra.mxu0 0.0
  %882 = vmatprep.subr.mxu0 0.0
  %883 = vmatpush1.msra.mxu0 0.0
  %884 = vmatprep.subr.mxu0 0.0
  %885 = vmatpush1.msra.mxu0 0.0
  %886 = vmatprep.subr.mxu0 0.0
  %887 = vmatpush1.msra.mxu0 0.0
  %888 = vmatprep.subr.mxu0 0.0
  %v889 = vand.u32 %v549, 4294901760
  %v890 = vsub.f32 %v549, %v889
  %v891 = vand.u32 %v890, 4294901760
  %892 = vmatpush1.msra.mxu0 %v891
  %893 = vmatprep.subr.mxu0 0.0
  %v894 = vand.u32 %v535, 4294901760
  %v895 = vsub.f32 %v535, %v894
  %v896 = vand.u32 %v895, 4294901760
  %897 = vmatpush1.msra.mxu0 %v896
  %898 = vmatprep.subr.mxu0 0.0
  %899 = vmatpush2.msra.mxu0 0.0
  %900 = vmatprep.subr.mxu0 0.0
  %901 = vmatpush2.msra.mxu0 0.0
  %902 = vmatprep.subr.mxu0 0.0
  %903 = vmatpush2.msra.mxu0 0.0
  %904 = vmatprep.subr.mxu0 0.0
  %905 = vmatpush2.msra.mxu0 0.0
  %906 = vmatprep.subr.mxu0 0.0
  %907 = vmatpush2.msra.mxu0 0.0
  %908 = vmatprep.subr.mxu0 0.0
  %909 = vmatpush2.msra.mxu0 0.0
  %910 = vmatprep.subr.mxu0 0.0
  %911 = vmatpush2.msra.mxu0 0.0
  %912 = vmatprep.subr.mxu0 0.0
  %913 = vmatpush2.msra.mxu0 0.0
  %914 = vmatprep.subr.mxu0 0.0
  %915 = vmatpush2.msra.mxu0 0.0
  %916 = vmatprep.subr.mxu0 0.0
  %917 = vmatpush2.msra.mxu0 0.0
  %918 = vmatprep.subr.mxu0 0.0
  %919 = vmatpush2.msra.mxu0 0.0
  %920 = vmatprep.subr.mxu0 0.0
  %921 = vmatpush2.msra.mxu0 0.0
  %922 = vmatprep.subr.mxu0 0.0
  %923 = vmatpush2.msra.mxu0 0.0
  %924 = vmatprep.subr.mxu0 0.0
  %925 = vmatpush2.msra.mxu0 0.0
  %926 = vmatprep.subr.mxu0 0.0
  %927 = vmatpush2.msra.mxu0 0.0
  %928 = vmatprep.subr.mxu0 0.0
  %929 = vmatpush2.msra.mxu0 0.0
  %930 = vmatprep.mubr.f32.mxu0 0.0
  %v931 = vand.u32 %v546, 4294901760
  %932 = vmatmul.mubr.f32.gmra.mxu0 %v931
  %v933 = vpop.f32.mrf.mxu0
  %v934 = vadd.f32 %v857, %v933
  %v935 = vpop.f32.mrf.mxu0
  %936 = vdwg.mxu0
  %937 = vmatprep.subr.mxu0 0.0
  %938 = vmatpush1.msra.mxu0 0.0
  %939 = vmatprep.subr.mxu0 0.0
  %940 = vmatpush1.msra.mxu0 0.0
  %941 = vmatprep.subr.mxu0 0.0
  %942 = vmatpush1.msra.mxu0 0.0
  %943 = vmatprep.subr.mxu0 0.0
  %944 = vmatpush1.msra.mxu0 0.0
  %945 = vmatprep.subr.mxu0 0.0
  %946 = vmatpush1.msra.mxu0 0.0
  %947 = vmatprep.subr.mxu0 0.0
  %948 = vmatpush1.msra.mxu0 0.0
  %949 = vmatprep.subr.mxu0 0.0
  %950 = vmatpush1.msra.mxu0 0.0
  %951 = vmatprep.subr.mxu0 0.0
  %952 = vmatpush1.msra.mxu0 0.0
  %953 = vmatprep.subr.mxu0 0.0
  %954 = vmatpush1.msra.mxu0 0.0
  %955 = vmatprep.subr.mxu0 0.0
  %956 = vmatpush1.msra.mxu0 0.0
  %957 = vmatprep.subr.mxu0 0.0
  %958 = vmatpush1.msra.mxu0 0.0
  %959 = vmatprep.subr.mxu0 0.0
  %960 = vmatpush1.msra.mxu0 0.0
  %961 = vmatprep.subr.mxu0 0.0
  %962 = vmatpush1.msra.mxu0 0.0
  %963 = vmatprep.subr.mxu0 0.0
  %964 = vmatpush1.msra.mxu0 0.0
  %965 = vmatprep.subr.mxu0 0.0
  %v966 = vand.u32 %v549, 4294901760
  %967 = vmatpush1.msra.mxu0 %v966
  %968 = vmatprep.subr.mxu0 0.0
  %v969 = vand.u32 %v535, 4294901760
  %970 = vmatpush1.msra.mxu0 %v969
  %971 = vmatprep.subr.mxu0 0.0
  %972 = vmatpush2.msra.mxu0 0.0
  %973 = vmatprep.subr.mxu0 0.0
  %974 = vmatpush2.msra.mxu0 0.0
  %975 = vmatprep.subr.mxu0 0.0
  %976 = vmatpush2.msra.mxu0 0.0
  %977 = vmatprep.subr.mxu0 0.0
  %978 = vmatpush2.msra.mxu0 0.0
  %979 = vmatprep.subr.mxu0 0.0
  %980 = vmatpush2.msra.mxu0 0.0
  %981 = vmatprep.subr.mxu0 0.0
  %982 = vmatpush2.msra.mxu0 0.0
  %983 = vmatprep.subr.mxu0 0.0
  %984 = vmatpush2.msra.mxu0 0.0
  %985 = vmatprep.subr.mxu0 0.0
  %986 = vmatpush2.msra.mxu0 0.0
  %987 = vmatprep.subr.mxu0 0.0
  %988 = vmatpush2.msra.mxu0 0.0
  %989 = vmatprep.subr.mxu0 0.0
  %990 = vmatpush2.msra.mxu0 0.0
  %991 = vmatprep.subr.mxu0 0.0
  %992 = vmatpush2.msra.mxu0 0.0
  %993 = vmatprep.subr.mxu0 0.0
  %994 = vmatpush2.msra.mxu0 0.0
  %995 = vmatprep.subr.mxu0 0.0
  %996 = vmatpush2.msra.mxu0 0.0
  %997 = vmatprep.subr.mxu0 0.0
  %998 = vmatpush2.msra.mxu0 0.0
  %999 = vmatprep.subr.mxu0 0.0
  %1000 = vmatpush2.msra.mxu0 0.0
  %1001 = vmatprep.subr.mxu0 0.0
  %1002 = vmatpush2.msra.mxu0 0.0
  %1003 = vmatprep.mubr.f32.mxu0 0.0
  %v1004 = vand.u32 %v546, 4294901760
  %1005 = vmatmul.mubr.f32.gmra.mxu0 %v1004
  %v1006 = vpop.f32.mrf.mxu0
  %v1007 = vadd.f32 %v934, %v1006
  %v1008 = vpop.f32.mrf.mxu0
  %1009 = vdwg.mxu0
  %1010 = vst [vmem:[%s5] sm:$0x7] %v1007
  // Predicated region
  $region22: #{dnn_forward.1} parent=0 // pred_check
    _
  $region23: #{dnn_forward.1} parent=0 // pred_check_branch
    %1012 = sbr.rel (0) target = $region25
  $region24: #{dnn_forward.1} parent=0 // pred_region
    _
  $region25: #{dnn_forward.1} parent=0 // pred_fallthru
    _
  // Predicated region
  $region26: #{dnn_forward.1} parent=0 // pred_check
    _
  $region27: #{dnn_forward.1} parent=0 // pred_check_branch
    %1014 = sbr.rel (0) target = $region29
  $region28: #{dnn_forward.1} parent=0 // pred_region
    _
  $region29: #{dnn_forward.1} parent=0 // pred_fallthru
    _

</llo_original>
